<compile_context>
chip_gen: v7x
topology: tpu7x:2x2x1
jax: 0.10.0
libtpu: 0.0.40
codegen_flags: <defaults>
</compile_context>

<pallas_src>
import functools

import numpy as np
import jax
import jax.numpy as jnp
from jax.experimental import pallas as pl
from jax.experimental.pallas import tpu as pltpu


_LANES = 128      # lane width; accumulator is one lane-dense vreg row / sample
_TB_MAX = 32      # batch rows per tile (sublane-aligned when B >= 32)
_TN_MAX = 32768   # max lanes per reduction tile (large, lane-dense)


def _cdiv(a, b):
    return -(-a // b)


def _round_up(x, m):
    return _cdiv(x, m) * m


# ----------------------------------------------------------------------------
# Pallas kernel: tiled last-axis reduction with a resident accumulator output.
# ----------------------------------------------------------------------------
def _iou_sums_kernel(thr_ref, pred_ref, true_ref, out_ref, *,
                     n_total, tn, k_per_split, needs_mask):
    """Process one (tb, tn) tile and accumulate partial sums.

    out_ref is a lane-dense (tb, 128) f32 block that stays resident in VMEM
    across the reduction steps of its split (same block index for every k).
    Lanes 0 / 1 / 2 carry intersection / pred_sum / true_sum.
    """
    c = pl.program_id(0)          # N-split (megacore) index
    k = pl.program_id(2)          # reduction step within this split

    @pl.when(k == 0)
    def _():
        out_ref[...] = jnp.zeros_like(out_ref)

    thr = thr_ref[0]
    t = c * k_per_split + k       # logical (unclamped) tile index along N
    start = t * tn

    def accumulate(apply_mask):
        # Cast after the VMEM load (inputs may be bf16 to halve HBM traffic).
        pred = pred_ref[...].astype(jnp.float32)
        true = true_ref[...].astype(jnp.float32)
        sel = pred > thr
        if apply_mask:
            # Ragged last tile / over-range tile of the shorter split:
            # mask lanes whose global column is past N (N is trace-time static).
            col = start + jax.lax.broadcasted_iota(jnp.int32, pred.shape, 1)
            valid = col < n_total
            sel = jnp.logical_and(sel, valid)
            true = jnp.where(valid, true, 0.0)
        inter = jnp.sum(jnp.where(sel, true, 0.0), axis=1, keepdims=True)
        psum = jnp.sum(sel.astype(jnp.float32), axis=1, keepdims=True)
        tsum = jnp.sum(true, axis=1, keepdims=True)
        # Pack the three per-row partial sums into lanes 0..2 of the lane-dense
        # accumulator (single store instead of three (B,1) outputs).
        lane = jax.lax.broadcasted_iota(jnp.int32, out_ref.shape, 1)
        partial = jnp.where(lane == 0, inter,
                  jnp.where(lane == 1, psum,
                  jnp.where(lane == 2, tsum, 0.0)))
        out_ref[...] += partial

    if not needs_mask:
        # Every tile is full and in-range (static fact): single fast path.
        accumulate(False)
    else:
        is_full = (start + tn) <= n_total

        @pl.when(is_full)
        def _():
            accumulate(False)

        @pl.when(jnp.logical_not(is_full))
        def _():
            accumulate(True)


def iou_sums(y_pred_flat, y_true_flat, threshold):
    """y_pred_flat / y_true_flat: (B, N) float arrays (any float dtype).

    Returns (intersection, pred_sum, true_sum), each a (B,) float32 array.
    """
    B, N = y_pred_flat.shape

    # Reduction tiling: large lane-dense tiles, spread evenly over k steps.
    n_lanes = _round_up(max(N, 1), _LANES)
    k_hint = _cdiv(n_lanes, _TN_MAX)
    tn = _round_up(_cdiv(n_lanes, k_hint), _LANES)
    k_total = _cdiv(N, tn)

    # Batch tiling: whole batch in one block when small (block dim == full dim
    # is always legal), otherwise 32-row tiles.  Trailing garbage rows of a
    # ragged last batch block land in output rows >= B and are sliced off.
    tb = B if B <= _TB_MAX else _TB_MAX
    nb = _cdiv(B, tb)
    b_pad = nb * tb

    # Megacore N-split (v7x): two halves of the reduction range can run on the
    # two TensorCores; partial accumulators are summed in the wrapper.
    ns = 2 if k_total >= 2 else 1
    k_per_split = _cdiv(k_total, ns)
    needs_mask = ns * k_per_split * tn > N   # any ragged / over-range tile?

    def in_map(c, i, k, thr_ref):
        t = c * k_per_split + k
        # Clamp keeps the DMA in-bounds for the over-range tile of the shorter
        # split; that tile is fully masked out inside the kernel.
        return (i, jnp.minimum(t, k_total - 1))

    thr = jnp.reshape(threshold, (1,)).astype(jnp.float32)

    kernel = functools.partial(
        _iou_sums_kernel, n_total=N, tn=tn,
        k_per_split=k_per_split, needs_mask=needs_mask)

    # TODO(synk): f32 accumulation of 0/1 counts is exact only up to 2^24
    # elements per row; switch to int32 partials if C*H*W can exceed ~16M.
    out = pl.pallas_call(
        kernel,
        out_shape=jax.ShapeDtypeStruct((ns, b_pad, _LANES), jnp.float32),
        grid_spec=pltpu.PrefetchScalarGridSpec(
            num_scalar_prefetch=1,                       # threshold -> SMEM
            grid=(ns, nb, k_per_split),                  # reduction axis last
            in_specs=[
                pl.BlockSpec((tb, tn), in_map),
                pl.BlockSpec((tb, tn), in_map),
            ],
            # Accumulator: same output block for every k within a split.
            out_specs=pl.BlockSpec((None, tb, _LANES),
                                   lambda c, i, k, thr_ref: (c, i, 0)),
        ),
        compiler_params=pltpu.CompilerParams(
            dimension_semantics=("parallel", "parallel", "arbitrary"),
            vmem_limit_bytes=32 * 1024 * 1024,           # fits v7x's 64 MiB VMEM
        ),
    )(thr, y_pred_flat, y_true_flat)

    sums = jnp.sum(out, axis=0)[:B]                      # (B, 128)
    return sums[:, 0], sums[:, 1], sums[:, 2]


# ----------------------------------------------------------------------------
# Single jitted device epilogue: one kernel call + scalar metrics, one transfer.
# ----------------------------------------------------------------------------
def _device_metrics(y_pred, y_true, threshold):
    B = y_pred.shape[0]
    N = int(np.prod(y_pred.shape[1:]))

    pred_flat = y_pred.reshape(B, N)
    true_flat = y_true.reshape(B, N)
    # Keep native bf16/f16/f32; anything else (int, bool, f64) -> f32.
    if pred_flat.dtype not in (jnp.bfloat16, jnp.float16, jnp.float32):
        pred_flat = pred_flat.astype(jnp.float32)
    if true_flat.dtype not in (jnp.bfloat16, jnp.float16, jnp.float32):
        true_flat = true_flat.astype(jnp.float32)

    intersection, pred_sum, true_sum = iou_sums(pred_flat, true_flat, threshold)

    eps = 1e-6
    union = pred_sum + true_sum - intersection
    iou = (intersection + eps) / (union + eps)
    precision = intersection / (pred_sum + eps)
    recall = intersection / (true_sum + eps)
    f1 = 2 * precision * recall / (precision + recall + eps)
    return jnp.stack([jnp.mean(iou), jnp.mean(precision),
                      jnp.mean(recall), jnp.mean(f1)])


_device_metrics_jit = jax.jit(_device_metrics)


# ----------------------------------------------------------------------------
# Host-side connected-component counting for the CONN metric.
# TODO(synk): connected-component labeling has no clean Pallas equivalent;
# computed host-side (scipy.ndimage.label when available, BFS fallback).
# ----------------------------------------------------------------------------
def _count_components(mask):
    H, W = mask.shape
    visited = np.zeros_like(mask, dtype=bool)
    count = 0
    for i in range(H):
        for j in range(W):
            if mask[i, j] and not visited[i, j]:
                count += 1
                stack = [(i, j)]
                visited[i, j] = True
                while stack:
                    a, b = stack.pop()
                    for da, db in ((1, 0), (-1, 0), (0, 1), (0, -1)):
                        na, nb = a + da, b + db
                        if (0 <= na < H and 0 <= nb < W and mask[na, nb]
                                and not visited[na, nb]):
                            visited[na, nb] = True
                            stack.append((na, nb))
    return count


try:
    from scipy import ndimage as _ndimage

    def _num_components(mask):
        return int(_ndimage.label(mask)[1])
except Exception:  # pragma: no cover - scipy not installed
    def _num_components(mask):
        return _count_components(mask)


def _calculate_conn(pred_masks, true_masks):
    """pred_masks / true_masks: (B, H, W) boolean numpy arrays (channel 0)."""
    conn_values = []
    for pred_mask, true_mask in zip(pred_masks, true_masks):
        num_pred = _num_components(pred_mask)
        num_true = _num_components(true_mask)
        num_inter = _num_components(pred_mask & true_mask)
        if num_pred == 0 or num_true == 0:
            conn = 0.0
        else:
            conn = 2.0 * num_inter / (num_pred + num_true)
        conn_values.append(conn)
    return np.asarray(conn_values, dtype=np.float32)


# ----------------------------------------------------------------------------
# IoU module (forward pass) built around the Pallas kernel.
# ----------------------------------------------------------------------------
class IoU:
    def __init__(self, threshold=0.5):
        self.threshold = float(threshold)

    def __call__(self, y_pred, y_true):
        y_pred = jnp.asarray(y_pred)
        y_true = jnp.asarray(y_true)

        # Match F.interpolate(..., mode='nearest') when spatial shapes differ.
        if y_true.shape[2:] != y_pred.shape[2:]:
            # TODO(synk): jax.image.resize 'nearest' index convention may differ
            # from torch F.interpolate nearest by half a pixel in edge cases.
            y_true = jax.image.resize(
                y_true.astype(jnp.float32),
                y_true.shape[:2] + tuple(y_pred.shape[2:]),
                method="nearest",
            )

        # One kernel launch + one 4-float device->host transfer.
        vals = np.asarray(jax.block_until_ready(
            _device_metrics_jit(y_pred, y_true, jnp.float32(self.threshold))))

        # Connectivity metric uses channel 0 only -> transfer just that slice.
        pred_masks = np.asarray(y_pred[:, 0]) > self.threshold
        true_masks = np.asarray(y_true[:, 0]) > 0.5
        conn = _calculate_conn(pred_masks, true_masks)

        return {
            "iou": float(vals[0]),
            "precision": float(vals[1]),
            "recall": float(vals[2]),
            "f1": float(vals[3]),
            "conn": float(np.mean(conn)),
        }


if __name__ == "__main__":
    key = jax.random.PRNGKey(0)
    k1, k2, k3, k4 = jax.random.split(key, 4)

    def np_ref(yp, yt, thr=0.5, eps=1e-6):
        yp = np.asarray(yp, np.float64)
        yt = np.asarray(yt, np.float64)
        pm = (yp > thr).astype(np.float64)
        inter = (pm * yt).sum(axis=(1, 2, 3))
        psum = pm.sum(axis=(1, 2, 3))
        tsum = yt.sum(axis=(1, 2, 3))
        iou = (inter + eps) / (psum + tsum - inter + eps)
        pr = inter / (psum + eps)
        rc = inter / (tsum + eps)
        f1 = 2 * pr * rc / (pr + rc + eps)
        return [float(np.mean(v)) for v in (iou, pr, rc, f1)]

    # Primary small-shape test matching the module's forward.
    B, C, H, W = 2, 4, 16, 16
    y_pred = jax.random.uniform(k1, (B, C, H, W), dtype=jnp.float32)
    y_true = (jax.random.uniform(k2, (B, C, H, W)) > 0.5).astype(jnp.float32)

    metric_fn = IoU(threshold=0.5)
    metrics = metric_fn(y_pred, y_true)

    ref = np_ref(y_pred, y_true)
    for name, rv in zip(("iou", "precision", "recall", "f1"), ref):
        assert abs(metrics[name] - rv) < 1e-4, (name, metrics[name], rv)
    assert all(np.isfinite(v) for v in metrics.values())

    # Secondary check: exercises multi-tile reduction, the megacore N-split
    # axis, and in-kernel ragged-lane masking (N not a multiple of the tile).
    B2, C2, H2, W2 = 3, 4, 97, 97
    yp2 = jax.random.uniform(k3, (B2, C2, H2, W2), dtype=jnp.float32)
    yt2 = (jax.random.uniform(k4, (B2, C2, H2, W2)) > 0.5).astype(jnp.float32)
    vals2 = np.asarray(jax.block_until_ready(
        _device_metrics_jit(yp2, yt2, jnp.float32(0.5))))
    ref2 = np_ref(yp2, yt2)
    for got, want in zip(vals2, ref2):
        assert abs(float(got) - want) < 1e-4, (float(got), want)

    print("KERNEL_OK")
</pallas_src>

<mosaic_0001>
module attributes {stable_mosaic.version = 11 : i64} {
  func.func @_iou_sums_kernel(%arg0: i32, %arg1: i32, %arg2: i32, %arg3: memref<1xf32, #tpu.memory_space<smem>>, %arg4: memref<2x1024xf32, #tpu.memory_space<vmem>>, %arg5: memref<2x1024xf32, #tpu.memory_space<vmem>>, %arg6: memref<1x2x128xf32, #tpu.memory_space<vmem>>) attributes {dimension_semantics = [#tpu.dimension_semantics<parallel>, #tpu.dimension_semantics<parallel>, #tpu.dimension_semantics<arbitrary>], iteration_bounds = array<i64: 1, 1, 1>, scalar_prefetch = 1 : i64, scratch_operands = 0 : i64, tpu.core_type = #tpu.core_type<tc>, window_params = [{transform_indices = @transform_0, window_bounds = array<i64: 2, 1024>}, {transform_indices = @transform_1, window_bounds = array<i64: 2, 1024>}, {transform_indices = @transform_2, window_bounds = array<i64: 1, 2, 128>}]} {
    %c0_i32 = arith.constant 0 : i32
    %0 = arith.cmpi eq, %arg2, %c0_i32 : i32
    %1 = arith.extui %0 : i1 to i32
    %c0_i32_0 = arith.constant 0 : i32
    %2 = arith.cmpi ne, %1, %c0_i32_0 : i32
    scf.if %2 {
      %cst_16 = arith.constant 0.000000e+00 : f32
      %41 = vector.broadcast %cst_16 : f32 to vector<2x128xf32>
      %c0_17 = arith.constant 0 : index
      %c0_18 = arith.constant 0 : index
      %c0_19 = arith.constant 0 : index
      %42 = vector.load %arg6[%c0_17, %c0_18, %c0_19] : memref<1x2x128xf32, #tpu.memory_space<vmem>>, vector<1x2x128xf32>
      %43 = vector.shape_cast %42 : vector<1x2x128xf32> to vector<2x128xf32>
      %44 = vector.shape_cast %41 : vector<2x128xf32> to vector<1x2x128xf32>
      tpu.vector_store %arg6[%c0_17, %c0_18, %c0_19], %44 {strides = array<i32>} : memref<1x2x128xf32, #tpu.memory_space<vmem>>, vector<1x2x128xf32>,
    } else {
    }
    %c0 = arith.constant 0 : index
    %3 = memref.load %arg3[%c0] : memref<1xf32, #tpu.memory_space<smem>>
    %c0_1 = arith.constant 0 : index
    %c0_2 = arith.constant 0 : index
    %4 = vector.load %arg4[%c0_1, %c0_2] : memref<2x1024xf32, #tpu.memory_space<vmem>>, vector<2x1024xf32>
    %c0_3 = arith.constant 0 : index
    %c0_4 = arith.constant 0 : index
    %5 = vector.load %arg5[%c0_3, %c0_4] : memref<2x1024xf32, #tpu.memory_space<vmem>>, vector<2x1024xf32>
    %6 = vector.broadcast %3 : f32 to vector<2x1024xf32>
    %7 = arith.cmpf ogt, %4, %6 : vector<2x1024xf32>
    %cst = arith.constant 0.000000e+00 : f32
    %8 = vector.broadcast %cst : f32 to vector<2x1024xf32>
    %9 = arith.select %7, %5, %8 : vector<2x1024xi1>, vector<2x1024xf32>
    %cst_5 = arith.constant dense<0.000000e+00> : vector<2xf32>
    %10 = vector.multi_reduction <add>, %9, %cst_5 [1] : vector<2x1024xf32> to vector<2xf32>
    %11 = vector.shape_cast %10 : vector<2xf32> to vector<2x1xf32>
    %12 = arith.extui %7 : vector<2x1024xi1> to vector<2x1024xi32>
    %13 = arith.sitofp %12 : vector<2x1024xi32> to vector<2x1024xf32>
    %cst_6 = arith.constant dense<0.000000e+00> : vector<2xf32>
    %14 = vector.multi_reduction <add>, %13, %cst_6 [1] : vector<2x1024xf32> to vector<2xf32>
    %15 = vector.shape_cast %14 : vector<2xf32> to vector<2x1xf32>
    %cst_7 = arith.constant dense<0.000000e+00> : vector<2xf32>
    %16 = vector.multi_reduction <add>, %5, %cst_7 [1] : vector<2x1024xf32> to vector<2xf32>
    %17 = vector.shape_cast %16 : vector<2xf32> to vector<2x1xf32>
    %18 = tpu.iota {dimensions = array<i32: 1>} : vector<2x128xi32>
    %c0_i32_8 = arith.constant 0 : i32
    %19 = vector.broadcast %c0_i32_8 : i32 to vector<2x128xi32>
    %20 = arith.cmpi eq, %18, %19 : vector<2x128xi32>
    %c1_i32 = arith.constant 1 : i32
    %21 = vector.broadcast %c1_i32 : i32 to vector<2x128xi32>
    %22 = arith.cmpi eq, %18, %21 : vector<2x128xi32>
    %c2_i32 = arith.constant 2 : i32
    %23 = vector.broadcast %c2_i32 : i32 to vector<2x128xi32>
    %24 = arith.cmpi eq, %18, %23 : vector<2x128xi32>
    %cst_9 = arith.constant 0.000000e+00 : f32
    %25 = vector.shape_cast %17 : vector<2x1xf32> to vector<2x1xf32>
    %26 = vector.broadcast %25 : vector<2x1xf32> to vector<2x128xf32>
    %27 = vector.broadcast %cst_9 : f32 to vector<2x128xf32>
    %28 = arith.select %24, %26, %27 : vector<2x128xi1>, vector<2x128xf32>
    %29 = vector.shape_cast %15 : vector<2x1xf32> to vector<2x1xf32>
    %30 = vector.broadcast %29 : vector<2x1xf32> to vector<2x128xf32>
    %31 = arith.select %22, %30, %28 : vector<2x128xi1>, vector<2x128xf32>
    %32 = vector.shape_cast %11 : vector<2x1xf32> to vector<2x1xf32>
    %33 = vector.broadcast %32 : vector<2x1xf32> to vector<2x128xf32>
    %34 = arith.select %20, %33, %31 : vector<2x128xi1>, vector<2x128xf32>
    %c0_10 = arith.constant 0 : index
    %c0_11 = arith.constant 0 : index
    %c0_12 = arith.constant 0 : index
    %35 = vector.load %arg6[%c0_10, %c0_11, %c0_12] : memref<1x2x128xf32, #tpu.memory_space<vmem>>, vector<1x2x128xf32>
    %36 = vector.shape_cast %35 : vector<1x2x128xf32> to vector<2x128xf32>
    %37 = arith.addf %36, %34 : vector<2x128xf32>
    %c0_13 = arith.constant 0 : index
    %c0_14 = arith.constant 0 : index
    %c0_15 = arith.constant 0 : index
    %38 = vector.load %arg6[%c0_13, %c0_14, %c0_15] : memref<1x2x128xf32, #tpu.memory_space<vmem>>, vector<1x2x128xf32>
    %39 = vector.shape_cast %38 : vector<1x2x128xf32> to vector<2x128xf32>
    %40 = vector.shape_cast %37 : vector<2x128xf32> to vector<1x2x128xf32>
    tpu.vector_store %arg6[%c0_13, %c0_14, %c0_15], %40 {strides = array<i32>} : memref<1x2x128xf32, #tpu.memory_space<vmem>>, vector<1x2x128xf32>,
    return
  }
  func.func @transform_0(%arg0: i32, %arg1: i32, %arg2: i32, %arg3: memref<1xf32, #tpu.memory_space<smem>>) -> (i32, i32) {
    %c1_i32 = arith.constant 1 : i32
    %0 = arith.muli %arg0, %c1_i32 : i32
    %1 = arith.addi %0, %arg2 : i32
    %c0_i32 = arith.constant 0 : i32
    %2 = arith.minsi %1, %c0_i32 : i32
    %c0_i32_0 = arith.constant 0 : i32
    return %arg1, %2 : i32, i32
  }
  func.func @transform_1(%arg0: i32, %arg1: i32, %arg2: i32, %arg3: memref<1xf32, #tpu.memory_space<smem>>) -> (i32, i32) {
    %c1_i32 = arith.constant 1 : i32
    %0 = arith.muli %arg0, %c1_i32 : i32
    %1 = arith.addi %0, %arg2 : i32
    %c0_i32 = arith.constant 0 : i32
    %2 = arith.minsi %1, %c0_i32 : i32
    %c0_i32_0 = arith.constant 0 : i32
    return %arg1, %2 : i32, i32
  }
  func.func @transform_2(%arg0: i32, %arg1: i32, %arg2: i32, %arg3: memref<1xf32, #tpu.memory_space<smem>>) -> (i32, i32, i32) {
    %c0_i32 = arith.constant 0 : i32
    %c0_i32_0 = arith.constant 0 : i32
    return %arg0, %arg1, %c0_i32 : i32, i32, i32
  }
}

</mosaic_0001>

<llo_original>
// kernel: _device_metrics.1
$region0: #{_device_metrics.1}
  #allocation0 [shape = 'u32[]', space=smem, size = 0x4, offset = 0x4, fixed_abs, tag = 'smem constant byte address 0x4 - core index']
  #allocation1 [shape = 'u32[144,128]{1,0:T(1,128)}', space=vmem, size = 0x12000, scoped, tag = 'internal scratch']
  #allocation2 [shape = 's32[1]{0}', space=sflag, size = 0x4, scoped, tag = 'scoped memory for _device_metrics.1']
  #allocation3 [shape = 'f32[1]{0:T(128)S(6)}', space=smem, size = 0x200, scoped, tag = 'prefetched SMEM operand 0']
  %s0 = inlined_call_operand.<no memory space> [shape: f32[1], index: 0, kind: input, shape index: {}]
  %s1 = inlined_call_operand.vmem [shape: f32[2,1024], index: 1, kind: input, shape index: {}]
  %s2 = inlined_call_operand.vmem [shape: f32[2,1024], index: 2, kind: input, shape index: {}]
  %s3 = inlined_call_operand.vmem [shape: f32[1,2,128], index: 3, kind: output, shape index: {}]
  %s4 = sld [smem:[#allocation0]]
  $region22: #{_device_metrics.1} parent=0
    _
  %s6 = ssub.s32 1, %s4
  %s7 = scalar_select 0, %s6, %s4
  %8 = sst [smem:[#allocation3]] %s0
  // Predicated region
  $region2: #{_device_metrics.1} parent=0 // pred_check
    _
  $region3: #{_device_metrics.1} parent=0 // pred_check_branch
    %10 = sbr.rel (0) target = $region5
  $region4: #{_device_metrics.1} parent=0 // pred_region
    %s11 = sadd.s32 0, 0
    %p12 = scmp.lt.s32.totalorder %s11, 0
    %s13 = scalar_select %p12, %s11, 0
    %s14 = smul.u32 8, %s13
    %p15 = scmp.lt.s32.totalorder %s14, 7
    %s16 = scalar_select %p15, %s14, 7
    %s17 = smul.addr %s16, 2
    %s18 = scalar_lea.vmem %s1, %s17
    %s19 = sadd.s32 0, 0
    %p20 = scmp.lt.s32.totalorder %s19, 0
    %s21 = scalar_select %p20, %s19, 0
    %s22 = smul.u32 8, %s21
  $region5: #{_device_metrics.1} parent=0 // pred_fallthru
    _
  // Predicated region
  $region6: #{_device_metrics.1} parent=0 // pred_check
    _
  $region7: #{_device_metrics.1} parent=0 // pred_check_branch
    %24 = sbr.rel (0) target = $region9
  $region8: #{_device_metrics.1} parent=0 // pred_region
    %s25 = sadd.s32 0, 0
    %p26 = scmp.lt.s32.totalorder %s25, 0
    %s27 = scalar_select %p26, %s25, 0
    %s28 = smul.u32 8, %s27
    %p29 = scmp.lt.s32.totalorder %s28, 7
    %s30 = scalar_select %p29, %s28, 7
    %s31 = smul.addr %s30, 2
    %s32 = scalar_lea.vmem %s2, %s31
    %s33 = sadd.s32 0, 0
    %p34 = scmp.lt.s32.totalorder %s33, 0
    %s35 = scalar_select %p34, %s33, 0
    %s36 = smul.u32 8, %s35
  $region9: #{_device_metrics.1} parent=0 // pred_fallthru
    _
  %s37 = sadd.s32 0, 0
  %p38 = scmp.lt.s32.totalorder %s37, 0
  %s39 = scalar_select %p38, %s37, 0
  %s40 = smul.u32 8, %s39
  %p41 = scmp.lt.s32.totalorder %s40, 7
  %s42 = scalar_select %p41, %s40, 7
  %s43 = smul.addr %s42, 2
  %s44 = scalar_lea.vmem %s1, %s43
  %s45 = sadd.s32 0, 0
  %p46 = scmp.lt.s32.totalorder %s45, 0
  %s47 = scalar_select %p46, %s45, 0
  %s48 = smul.u32 8, %s47
  %p49 = scmp.lt.s32.totalorder %s48, 7
  %s50 = scalar_select %p49, %s48, 7
  %s51 = smul.addr %s50, 2
  %s52 = scalar_lea.vmem %s2, %s51
  %s53 = sadd.s32 0, 0
  %p54 = scmp.lt.s32.totalorder %s53, 0
  %s55 = scalar_select %p54, %s53, 0
  %s56 = smul.u32 8, %s55
  %p57 = scmp.lt.s32.totalorder %s56, 7
  %s58 = scalar_select %p57, %s56, 7
  %s59 = smul.addr %s58, 2
  %s60 = scalar_lea.vmem %s1, %s59
  %s61 = sadd.s32 0, 0
  %p62 = scmp.lt.s32.totalorder %s61, 0
  %s63 = scalar_select %p62, %s61, 0
  %s64 = smul.u32 8, %s63
  %s65 = sadd.s32 0, 0
  %p66 = scmp.lt.s32.totalorder %s65, 0
  %s67 = scalar_select %p66, %s65, 0
  %s68 = smul.u32 8, %s67
  %p69 = scmp.lt.s32.totalorder %s68, 7
  %s70 = scalar_select %p69, %s68, 7
  %s71 = smul.addr %s70, 2
  %s72 = scalar_lea.vmem %s2, %s71
  %s73 = sadd.s32 0, 0
  %p74 = scmp.lt.s32.totalorder %s73, 0
  %s75 = scalar_select %p74, %s73, 0
  %s76 = smul.u32 8, %s75
  %p77 = scmp.eq.s32.totalorder 0, 0
  // Predicated region
  $region10: #{_device_metrics.1} parent=0 // pred_check
    %p78 = pneg %p77
  $region11: #{_device_metrics.1} parent=0 // pred_check_branch
    %80 = sbr.rel (%p78) target = $region13
  $region12: #{_device_metrics.1} parent=0 // pred_region
    %81 = vst [vmem:[%s3] sm:$0x3] 0.0
  $region13: #{_device_metrics.1} parent=0 // pred_fallthru
    _
  %s82 = sld [smem:[#allocation3]]
  %v83 = vld [vmem:[%s60] sm:$0xff]
  %v84 = vld [vmem:[%s60 + $0x8] sm:$0xff]
  %v85 = vld [vmem:[%s72] sm:$0xff]
  %v86 = vld [vmem:[%s72 + $0x8] sm:$0xff]
  %v87 = vstv %s82
  %vm88 = vcmp.gt.f32.partialorder %v83, %v87
  %vm89 = vcmp.gt.f32.partialorder %v84, %v87
  %v90 = vsel %vm88, %v85, 0.0
  %v91 = vsel %vm89, %v86, 0.0
  %v94 = vcombine.high %v90, %v90
  %v96 = vunpack.c.l.s4 1983009808
  %v97 = vunpack.c.0.s8 %v96
  %v98 = vlaneseq
  %v99 = vshrl.u32 %v98, 7
  %v100 = vsub.s32 %v97, %v99
  %v101 = vrot.slane %v90, %v100
  %v103 = vunpack.c.l.s4 1983009808
  %v104 = vunpack.c.0.s8 %v103
  %v105 = vlaneseq
  %v106 = vshrl.u32 %v105, 7
  %v107 = vsub.s32 %v104, %v106
  %v108 = vrot.slane %v94, %v107
  %v109 = vcombine.high %v101, %v101
  %v110 = vcombine.high %v108, %v108
  %v111 = vcombine.high %v91, %v91
  %v113 = vunpack.c.l.s4 1983009808
  %v114 = vunpack.c.0.s8 %v113
  %v115 = vlaneseq
  %v116 = vshrl.u32 %v115, 7
  %v117 = vsub.s32 %v114, %v116
  %v118 = vrot.slane %v91, %v117
  %v120 = vunpack.c.l.s4 1983009808
  %v121 = vunpack.c.0.s8 %v120
  %v122 = vlaneseq
  %v123 = vshrl.u32 %v122, 7
  %v124 = vsub.s32 %v121, %v123
  %v125 = vrot.slane %v111, %v124
  %v126 = vcombine.high %v118, %v118
  %v127 = vcombine.high %v125, %v125
  %vm136 = vcmask 1041408
  %v137 = vsel %vm136, %v101, 0.0
  %v138 = vsel %vm136, %v109, 0.0
  %v139 = vadd.f32 %v137, %v138
  %v140 = vsel %vm136, %v108, 0.0
  %v141 = vadd.f32 %v139, %v140
  %v142 = vsel %vm136, %v110, 0.0
  %v143 = vadd.f32 %v141, %v142
  %v144 = vsel %vm136, %v118, 0.0
  %v145 = vadd.f32 %v143, %v144
  %v146 = vsel %vm136, %v126, 0.0
  %v147 = vadd.f32 %v145, %v146
  %v148 = vsel %vm136, %v125, 0.0
  %v149 = vadd.f32 %v147, %v148
  %v150 = vsel %vm136, %v127, 0.0
  %v151 = vadd.f32 %v149, %v150
  %152 = vadd.xlane.f32.xlu0 %v151
  %v153 = vpop.xlane.xlu0 %152
  %v154 = vsel %vm88, 1, 0
  %v155 = vsel %vm89, 1, 0
  %v156 = vcvt.s32.f32 %v154
  %v157 = vcvt.s32.f32 %v155
  %v160 = vcombine.high %v156, %v156
  %v162 = vunpack.c.l.s4 1983009808
  %v163 = vunpack.c.0.s8 %v162
  %v164 = vlaneseq
  %v165 = vshrl.u32 %v164, 7
  %v166 = vsub.s32 %v163, %v165
  %v167 = vrot.slane %v156, %v166
  %v169 = vunpack.c.l.s4 1983009808
  %v170 = vunpack.c.0.s8 %v169
  %v171 = vlaneseq
  %v172 = vshrl.u32 %v171, 7
  %v173 = vsub.s32 %v170, %v172
  %v174 = vrot.slane %v160, %v173
  %v175 = vcombine.high %v167, %v167
  %v176 = vcombine.high %v174, %v174
  %v177 = vcombine.high %v157, %v157
  %v179 = vunpack.c.l.s4 1983009808
  %v180 = vunpack.c.0.s8 %v179
  %v181 = vlaneseq
  %v182 = vshrl.u32 %v181, 7
  %v183 = vsub.s32 %v180, %v182
  %v184 = vrot.slane %v157, %v183
  %v186 = vunpack.c.l.s4 1983009808
  %v187 = vunpack.c.0.s8 %v186
  %v188 = vlaneseq
  %v189 = vshrl.u32 %v188, 7
  %v190 = vsub.s32 %v187, %v189
  %v191 = vrot.slane %v177, %v190
  %v192 = vcombine.high %v184, %v184
  %v193 = vcombine.high %v191, %v191
  %v202 = vsel %vm136, %v167, 0.0
  %v203 = vsel %vm136, %v175, 0.0
  %v204 = vadd.f32 %v202, %v203
  %v205 = vsel %vm136, %v174, 0.0
  %v206 = vadd.f32 %v204, %v205
  %v207 = vsel %vm136, %v176, 0.0
  %v208 = vadd.f32 %v206, %v207
  %v209 = vsel %vm136, %v184, 0.0
  %v210 = vadd.f32 %v208, %v209
  %v211 = vsel %vm136, %v192, 0.0
  %v212 = vadd.f32 %v210, %v211
  %v213 = vsel %vm136, %v191, 0.0
  %v214 = vadd.f32 %v212, %v213
  %v215 = vsel %vm136, %v193, 0.0
  %v216 = vadd.f32 %v214, %v215
  %217 = vadd.xlane.f32.xlu0 %v216
  %v218 = vpop.xlane.xlu0 %217
  %v221 = vcombine.high %v85, %v85
  %v223 = vunpack.c.l.s4 1983009808
  %v224 = vunpack.c.0.s8 %v223
  %v225 = vlaneseq
  %v226 = vshrl.u32 %v225, 7
  %v227 = vsub.s32 %v224, %v226
  %v228 = vrot.slane %v85, %v227
  %v230 = vunpack.c.l.s4 1983009808
  %v231 = vunpack.c.0.s8 %v230
  %v232 = vlaneseq
  %v233 = vshrl.u32 %v232, 7
  %v234 = vsub.s32 %v231, %v233
  %v235 = vrot.slane %v221, %v234
  %v236 = vcombine.high %v228, %v228
  %v237 = vcombine.high %v235, %v235
  %v238 = vcombine.high %v86, %v86
  %v240 = vunpack.c.l.s4 1983009808
  %v241 = vunpack.c.0.s8 %v240
  %v242 = vlaneseq
  %v243 = vshrl.u32 %v242, 7
  %v244 = vsub.s32 %v241, %v243
  %v245 = vrot.slane %v86, %v244
  %v247 = vunpack.c.l.s4 1983009808
  %v248 = vunpack.c.0.s8 %v247
  %v249 = vlaneseq
  %v250 = vshrl.u32 %v249, 7
  %v251 = vsub.s32 %v248, %v250
  %v252 = vrot.slane %v238, %v251
  %v253 = vcombine.high %v245, %v245
  %v254 = vcombine.high %v252, %v252
  %v263 = vsel %vm136, %v228, 0.0
  %v264 = vsel %vm136, %v236, 0.0
  %v265 = vadd.f32 %v263, %v264
  %v266 = vsel %vm136, %v235, 0.0
  %v267 = vadd.f32 %v265, %v266
  %v268 = vsel %vm136, %v237, 0.0
  %v269 = vadd.f32 %v267, %v268
  %v270 = vsel %vm136, %v245, 0.0
  %v271 = vadd.f32 %v269, %v270
  %v272 = vsel %vm136, %v253, 0.0
  %v273 = vadd.f32 %v271, %v272
  %v274 = vsel %vm136, %v252, 0.0
  %v275 = vadd.f32 %v273, %v274
  %v276 = vsel %vm136, %v254, 0.0
  %v277 = vadd.f32 %v275, %v276
  %278 = vadd.xlane.f32.xlu0 %v277
  %v279 = vpop.xlane.xlu0 %278
  %v280 = vlaneseq
  %v281 = vand.u32 %v280, 127
  %vm282 = vcmp.eq.s32.totalorder %v281, 0
  %vm283 = vcmp.eq.s32.totalorder %v281, 1
  %vm284 = vcmp.eq.s32.totalorder %v281, 2
  %v285 = vsel %vm284, %v279, 0.0
  %v286 = vsel %vm283, %v218, %v285
  %v287 = vsel %vm282, %v153, %v286
  %v288 = vld [vmem:[%s3] sm:$0x3]
  %v289 = vadd.f32 %v288, %v287
  %290 = vst [vmem:[%s3] sm:$0x3] %v289
  // Predicated region
  $region14: #{_device_metrics.1} parent=0 // pred_check
    _
  $region15: #{_device_metrics.1} parent=0 // pred_check_branch
    %292 = sbr.rel (0) target = $region17
  $region16: #{_device_metrics.1} parent=0 // pred_region
    _
  $region17: #{_device_metrics.1} parent=0 // pred_fallthru
    _
  // Predicated region
  $region18: #{_device_metrics.1} parent=0 // pred_check
    _
  $region19: #{_device_metrics.1} parent=0 // pred_check_branch
    %294 = sbr.rel (0) target = $region21
  $region20: #{_device_metrics.1} parent=0 // pred_region
    _
  $region21: #{_device_metrics.1} parent=0 // pred_fallthru
    _

</llo_original>
